<compile_context>
chip_gen: v7x
topology: tpu7x:2x2x1
jax: 0.10.0
libtpu: 0.0.40
codegen_flags: <defaults>
</compile_context>

<pallas_src>
import functools

import jax
import jax.numpy as jnp
from jax import lax
from jax.experimental import pallas as pl
from jax.experimental.pallas import tpu as pltpu


def _round_up(v: int, m: int) -> int:
    return ((v + m - 1) // m) * m


def _sublane_quantum(dtype) -> int:
    # min second-to-last tile dim: 8 for 4-byte, 16 for 2-byte, 32 for 1-byte.
    return max(8, 32 // jnp.dtype(dtype).itemsize)


def _choose_tile(dim: int, max_tile: int, quantum: int):
    """Pick (tile, padded_dim): tile is a multiple of `quantum`, <= max_tile
    (when possible), divides padded_dim.  Prefers exact divisors of the
    quantum-aligned dim (no padding); falls back to padding when the only
    exact divisors are tiny."""
    base = _round_up(dim, quantum)
    cap = min(max_tile, base)
    cap -= cap % quantum
    if cap < quantum:
        return quantum, base
    best = quantum
    t = cap
    while t >= quantum:
        if base % t == 0:
            best = t
            break
        t -= quantum
    if best * 2 >= cap:
        return best, base
    return cap, _round_up(base, cap)


def _tanh_cast_kernel(x_ref, o_ref):
    # One pass over x: tanh at f32 precision (EUP), cast to the MXU operand
    # dtype.  Runs once per element, so it is off the matmul critical loop.
    # TODO(synk): v6e/v7x could use a bf16-native tanh path and skip the casts.
    o_ref[...] = jnp.tanh(x_ref[...].astype(jnp.float32)).astype(o_ref.dtype)


def _fc_matmul_kernel(x_ref, w_ref, b_ref, o_ref, acc_ref, *,
                      inline_tanh: bool, mxu_dtype):
    k = pl.program_id(2)

    @pl.when(k == 0)
    def _init():
        acc_ref[...] = jnp.zeros_like(acc_ref)

    x = x_ref[...]
    if inline_tanh:
        # Only taken when the N grid has a single tile, so each x tile is
        # activated exactly once (no redundant EUP work).
        x = jnp.tanh(x.astype(jnp.float32))
    x = x.astype(mxu_dtype)                 # no-op when dtypes already match
    w = w_ref[...].astype(mxu_dtype)        # no-op when dtypes already match

    # x:(tm,tk) contracted with w:(tn,tk) on the last dim of both operands
    # (A·Bᵀ): the MXU consumes the PyTorch-layout weight tile directly --
    # no wrapper transpose, no in-kernel XLU transpose.
    acc_ref[...] += lax.dot_general(
        x, w,
        dimension_numbers=(((1,), (1,)), ((), ())),
        preferred_element_type=jnp.float32)

    @pl.when(k == pl.num_programs(2) - 1)
    def _epilogue():
        y = acc_ref[...] + b_ref[...].astype(jnp.float32)   # bias added once
        o_ref[...] = y.astype(o_ref.dtype)


def fc_layer(x, weight, bias, use_activation=True, *,
             tm=512, tn=512, tk=1024, compute_dtype=None):
    """Pallas FCLayer.forward (eval mode, dropout_rate=0.0).

    x:      (B, D_in)
    weight: (D_out, D_in)   -- PyTorch nn.Linear convention (NOT transposed)
    bias:   (D_out,)
    compute_dtype: optional MXU operand dtype (e.g. jnp.bfloat16) for the fast
                   MXU path; accumulation stays f32, output keeps x.dtype.
    returns (B, D_out)
    """
    # TODO(synk): training-mode dropout with rate > 0 would need
    # pltpu.prng_seed / pltpu.prng_random_bits; rate=0.0 here -> identity.
    x = jnp.asarray(x)
    weight = jnp.asarray(weight)
    bias = jnp.asarray(bias)

    B, D_in = x.shape
    D_out, D_in_w = weight.shape
    if D_in_w != D_in:
        raise ValueError("weight shape mismatch")

    out_dtype = x.dtype
    mxu_dtype = jnp.dtype(compute_dtype) if compute_dtype is not None else jnp.dtype(x.dtype)

    # ---- tile selection -----------------------------------------------------
    q_m = max(_sublane_quantum(x.dtype), _sublane_quantum(mxu_dtype))
    tm, Mp = _choose_tile(B, tm, q_m)
    grid_m = Mp // tm

    base_n = _round_up(D_out, 128)
    # v7x has 2 TensorCores; when the M axis degenerates to a single tile keep
    # the N ("parallel") axis at extent >= 2 so both cores get work.  For small
    # batch the per-step intensity is tm-dominated, so this costs ~nothing on
    # single-TC chips.
    if grid_m == 1 and base_n >= 256:
        tn = min(tn, max(128, (base_n // 2) // 128 * 128))
    tn, Np = _choose_tile(D_out, tn, 128)
    tk, Kp = _choose_tile(D_in, tk, 128)
    grid_n = Np // tn
    grid_k = Kp // tk

    # ---- padding (usually a no-op: common BERT dims are multiples of 128) ----
    # NOTE: for repeated calls with fixed params, pad weight/bias once at
    # parameter-load time and pass the padded arrays to avoid per-call copies.
    xp = x if (Mp == B and Kp == D_in) else jnp.pad(x, ((0, Mp - B), (0, Kp - D_in)))
    wp = weight if (Np == D_out and Kp == D_in) else jnp.pad(
        weight, ((0, Np - D_out), (0, Kp - D_in)))
    bp = bias.reshape(1, D_out)
    if Np != D_out:
        bp = jnp.pad(bp, ((0, 0), (0, Np - D_out)))

    # ---- activation: one-pass pre-kernel when the N grid has >1 tile ---------
    inline_tanh = bool(use_activation)
    a = xp
    if use_activation and grid_n > 1:
        a = pl.pallas_call(
            _tanh_cast_kernel,
            out_shape=jax.ShapeDtypeStruct((Mp, Kp), mxu_dtype),
            grid_spec=pltpu.PrefetchScalarGridSpec(
                num_scalar_prefetch=0,
                grid=(grid_m, grid_k),
                in_specs=[pl.BlockSpec((tm, tk), lambda i, k: (i, k))],
                out_specs=pl.BlockSpec((tm, tk), lambda i, k: (i, k)),
            ),
            compiler_params=pltpu.CompilerParams(
                dimension_semantics=("parallel", "parallel"),
            ),
        )(xp)
        inline_tanh = False

    # ---- matmul + bias --------------------------------------------------------
    vmem_bytes = (2 * tm * tk * a.dtype.itemsize          # streamed x / tanh(x)
                  + 2 * tn * tk * wp.dtype.itemsize       # streamed weight
                  + 2 * tm * tn * jnp.dtype(out_dtype).itemsize
                  + 2 * tn * bp.dtype.itemsize
                  + tm * tn * 4)                          # f32 accumulator
    vmem_limit = min(64 << 20, max(32 << 20, (vmem_bytes * 3) // 2))

    kernel = functools.partial(_fc_matmul_kernel,
                               inline_tanh=inline_tanh, mxu_dtype=mxu_dtype)

    out = pl.pallas_call(
        kernel,
        out_shape=jax.ShapeDtypeStruct((Mp, Np), out_dtype),
        grid_spec=pltpu.PrefetchScalarGridSpec(
            num_scalar_prefetch=0,
            grid=(grid_m, grid_n, grid_k),
            in_specs=[
                pl.BlockSpec((tm, tk), lambda i, j, k: (i, k)),   # x / tanh(x)
                pl.BlockSpec((tn, tk), lambda i, j, k: (j, k)),   # W (PyTorch layout)
                pl.BlockSpec((1, tn), lambda i, j, k: (0, j)),    # bias
            ],
            out_specs=pl.BlockSpec((tm, tn), lambda i, j, k: (i, j)),
            scratch_shapes=[pltpu.VMEM((tm, tn), jnp.float32)],
        ),
        compiler_params=pltpu.CompilerParams(
            dimension_semantics=("parallel", "parallel", "arbitrary"),
            vmem_limit_bytes=int(vmem_limit),
        ),
        # pipeline_mode=pl.Buffered(3) on the x/W specs is a further option if a
        # trace still shows exposed DMA; left at default double-buffering here.
    )(a, wp, bp)

    if Mp != B or Np != D_out:
        out = out[:B, :D_out]
    return out


if __name__ == "__main__":
    key = jax.random.PRNGKey(0)
    kx, kw, kb = jax.random.split(key, 3)

    # Small, deliberately non-tile-multiple shapes to exercise padding.
    B, D_in, D_out = 10, 384, 320
    x = jax.random.normal(kx, (B, D_in), dtype=jnp.float32)
    bound = 1.0 / (D_in ** 0.5)
    weight = jax.random.uniform(kw, (D_out, D_in), minval=-bound, maxval=bound,
                                dtype=jnp.float32)
    bias = jax.random.uniform(kb, (D_out,), minval=-bound, maxval=bound,
                              dtype=jnp.float32)

    ref_act = jnp.tanh(x) @ weight.T + bias
    ref_lin = x @ weight.T + bias

    # 1) activation path, small tiles -> multi-tile N grid (tanh pre-pass) and
    #    a multi-step K reduction through the f32 accumulator.
    out = jax.block_until_ready(fc_layer(x, weight, bias, True, tm=64, tn=128, tk=128))
    assert out.shape == (B, D_out)
    assert jnp.allclose(out, ref_act, atol=1e-4, rtol=1e-5), "activation (pre-pass) mismatch"

    # 2) no-activation path, same tiling.
    out = jax.block_until_ready(fc_layer(x, weight, bias, False, tm=64, tn=128, tk=128))
    assert jnp.allclose(out, ref_lin, atol=1e-4, rtol=1e-5), "no-activation path mismatch"

    # 3) classifier-head shape (tiny D_out) with default tiles -> single N tile,
    #    tanh fused inline, single K step.
    D_lbl = 3
    w2 = jax.random.uniform(kw, (D_lbl, D_in), minval=-bound, maxval=bound, dtype=jnp.float32)
    b2 = jax.random.uniform(kb, (D_lbl,), minval=-bound, maxval=bound, dtype=jnp.float32)
    ref2 = jnp.tanh(x) @ w2.T + b2
    out = jax.block_until_ready(fc_layer(x, w2, b2, True))
    assert out.shape == (B, D_lbl)
    assert jnp.allclose(out, ref2, atol=1e-4, rtol=1e-5), "activation (inline) mismatch"

    # 4) optional bf16 MXU-operand path (f32 accumulate), looser tolerance.
    out = jax.block_until_ready(
        fc_layer(x, weight, bias, True, tm=64, tn=128, tk=128, compute_dtype=jnp.bfloat16))
    assert jnp.allclose(out, ref_act, atol=5e-2, rtol=5e-2), "bf16 compute path mismatch"

    print("KERNEL_OK")
</pallas_src>

<mosaic_0001>
module attributes {stable_mosaic.version = 11 : i64} {
  func.func @_tanh_cast_kernel(%arg0: i32, %arg1: i32, %arg2: memref<16x128xf32, #tpu.memory_space<vmem>>, %arg3: memref<16x128xf32, #tpu.memory_space<vmem>>) attributes {dimension_semantics = [#tpu.dimension_semantics<parallel>, #tpu.dimension_semantics<parallel>], iteration_bounds = array<i64: 1, 3>, scalar_prefetch = 0 : i64, scratch_operands = 0 : i64, tpu.core_type = #tpu.core_type<tc>, window_params = [{transform_indices = @transform_0, window_bounds = array<i64: 16, 128>}, {transform_indices = @transform_1, window_bounds = array<i64: 16, 128>}]} {
    %c0 = arith.constant 0 : index
    %c0_0 = arith.constant 0 : index
    %0 = vector.load %arg2[%c0, %c0_0] : memref<16x128xf32, #tpu.memory_space<vmem>>, vector<16x128xf32>
    %1 = math.tanh %0 : vector<16x128xf32>
    %c0_1 = arith.constant 0 : index
    %c0_2 = arith.constant 0 : index
    %2 = vector.load %arg3[%c0_1, %c0_2] : memref<16x128xf32, #tpu.memory_space<vmem>>, vector<16x128xf32>
    tpu.vector_store %arg3[%c0_1, %c0_2], %1 {strides = array<i32>} : memref<16x128xf32, #tpu.memory_space<vmem>>, vector<16x128xf32>,
    return
  }
  func.func @transform_0(%arg0: i32, %arg1: i32) -> (i32, i32) {
    %c0_i32 = arith.constant 0 : i32
    return %arg0, %arg1 : i32, i32
  }
  func.func @transform_1(%arg0: i32, %arg1: i32) -> (i32, i32) {
    %c0_i32 = arith.constant 0 : i32
    return %arg0, %arg1 : i32, i32
  }
}

</mosaic_0001>

<llo_original>
// kernel: tpu_custom_call.1
$region0: #{tpu_custom_call.1}
  #allocation0 [shape = 'u32[]', space=smem, size = 0x4, offset = 0x4, fixed_abs, tag = 'smem constant byte address 0x4 - core index']
  #allocation1 [shape = 'u32[144,128]{1,0:T(1,128)}', space=vmem, size = 0x12000, scoped, tag = 'internal scratch']
  %s0 = inlined_call_operand.hbm [shape: f32[16,384], index: 0, kind: input, shape index: {}]
  %s1 = inlined_call_operand.hbm [shape: f32[16,384], index: 1, kind: output, shape index: {}]
  %s2 = sld [smem:[#allocation0]]
  $region41: #{tpu_custom_call.1} parent=0
    _
  %s4 = ssub.s32 1, %s2
  %s5 = scalar_select 0, %s4, %s2
  $region1: #{tpu_custom_call.1} parent=0
    #allocation2 [shape = 'u8[16384]{0}', space=vmem, size = 0x4000, scoped, tag = 'input window, operand 0']
    #allocation3 [shape = 's32[2]{0}', space=sflag, size = 0x8, scoped, tag = 'scoped memory for tpu_custom_call.1']
    #allocation4 [shape = 's32[2]{0}', space=sflag, size = 0x8, scoped, tag = 'scoped memory for tpu_custom_call.1']
    #allocation5 [shape = 'u8[16384]{0}', space=vmem, size = 0x4000, scoped, tag = 'output window, operand 0']
    %6 = vsyncpa [#allocation3], 0
    %s7 = scalar_lea.sflag [#allocation3], 1
    %8 = vsyncpa %s7, 0
    %9 = vsyncpa [#allocation4], 0
    %s10 = scalar_lea.sflag [#allocation4], 1
    %11 = vsyncpa %s10, 0
    loop: start=0, step=1, limit=5
    $region2: #{tpu_custom_call.1} parent=1 // loop_pre_header
      _
    $region3: #{tpu_custom_call.1} parent=1 // loop_header
      %s13 = sphi 0, %s17
      %p14 = scmp.ge.s32.totalorder %s13, 5
      %s20 = sphi 0, %s32
      %s21 = sphi 0, %s28
      %s22 = sphi 0, %s20
      %s23 = sphi 0, %s21
      %s24 = sphi 0, %s22
      %s25 = sphi 0, %s23
      %s37 = sphi 0, %s39
      %s40 = sphi 0, %s37
      %s41 = sphi 0, %s40
      %s57 = sphi 0, %s41
      %s65 = sphi 0, %s67
      %s68 = sphi 0, %s65
      %s69 = sphi 0, %s68
      %s85 = sphi 0, %s69
    $region4: #{tpu_custom_call.1} parent=1 // loop_header_branch
      %16 = sbr.rel (%p14) target = $region8
    $region5: #{tpu_custom_call.1} parent=1 // loop_body
      %s18 = ssub.s32 %s13, 1
      %s19 = ssub.s32 %s13, 2
      %s26 = sadd.s32 1, %s21
      %p27 = scmp.ge.s32.totalorder %s26, 3
      %s28 = scalar_select %p27, 0, %s26
      %s29 = sadd.s32 1, %s20
      %s30 = scalar_select %p27, %s29, %s20
      %p31 = scmp.ge.s32.totalorder %s30, 1
      %s32 = scalar_select %p31, 0, %s30
      %s33 = ssub.s32 %s20, %s32
      %s34 = ssub.s32 %s21, %s28
      %s35 = sor.u32 %s33, %s34
      %p36 = scmp.eq.s32.totalorder %s35, 0
      %s38 = sadd.s32 %s37, 1
      %s39 = scalar_select %p36, %s37, %s38
      %p42 = pneg %p36
      %p43 = scmp.eq.s32.totalorder %s13, 2
      %p44 = por %p42, %p43
      %p45 = scmp.ne.s32.totalorder %s37, %s40
      %p46 = scmp.eq.s32.totalorder %s13, 0
      %p47 = por %p45, %p46
      %p48 = scmp.ne.s32.totalorder %s37, %s40
      %p49 = scmp.eq.s32.totalorder %s18, 2
      %p50 = por %p48, %p49
      %p51 = scmp.ne.s32.totalorder %s40, %s41
      %p52 = scmp.eq.s32.totalorder %s18, 0
      %p53 = por %p51, %p52
      %p54 = scmp.ne.s32.totalorder %s40, %s41
      %p55 = scmp.eq.s32.totalorder %s19, 2
      %p56 = por %p54, %p55
      %p58 = scmp.ne.s32.totalorder %s41, %s57
      %p59 = scmp.eq.s32.totalorder %s19, 0
      %p60 = por %p58, %p59
      %s61 = ssub.s32 %s20, %s32
      %s62 = ssub.s32 %s21, %s28
      %s63 = sor.u32 %s61, %s62
      %p64 = scmp.eq.s32.totalorder %s63, 0
      %s66 = sadd.s32 %s65, 1
      %s67 = scalar_select %p64, %s65, %s66
      %p70 = pneg %p64
      %p71 = scmp.eq.s32.totalorder %s13, 2
      %p72 = por %p70, %p71
      %p73 = scmp.ne.s32.totalorder %s65, %s68
      %p74 = scmp.eq.s32.totalorder %s13, 0
      %p75 = por %p73, %p74
      %p76 = scmp.ne.s32.totalorder %s65, %s68
      %p77 = scmp.eq.s32.totalorder %s18, 2
      %p78 = por %p76, %p77
      %p79 = scmp.ne.s32.totalorder %s68, %s69
      %p80 = scmp.eq.s32.totalorder %s18, 0
      %p81 = por %p79, %p80
      %p82 = scmp.ne.s32.totalorder %s68, %s69
      %p83 = scmp.eq.s32.totalorder %s19, 2
      %p84 = por %p82, %p83
      %p86 = scmp.ne.s32.totalorder %s69, %s85
      %p87 = scmp.eq.s32.totalorder %s19, 0
      %p88 = por %p86, %p87
      %p89 = scmp.le.s32.totalorder 1, %s13
      %p90 = scmp.lt.s32.totalorder %s13, 4
      %p91 = pnand %p89, %p90
      %p92 = pneg %p91
      // Predicated region
      $region9: #{tpu_custom_call.1} parent=5 // pred_check
        _
      $region10: #{tpu_custom_call.1} parent=5 // pred_check_branch
        %94 = sbr.rel (%p91) target = $region12
      $region11: #{tpu_custom_call.1} parent=5 // pred_region
        %s95 = ssub.s32 %s13, 1
      $region12: #{tpu_custom_call.1} parent=5 // pred_fallthru
        _
      %p96 = scmp.lt.s32.totalorder %s13, 3
      // Predicated region
      $region13: #{tpu_custom_call.1} parent=5 // pred_check
        %p97 = pneg %p96
      $region14: #{tpu_custom_call.1} parent=5 // pred_check_branch
        %99 = sbr.rel (%p97) target = $region16
      $region15: #{tpu_custom_call.1} parent=5 // pred_region
        // Predicated region
        $region17: #{tpu_custom_call.1} parent=15 // pred_check
          %p100 = pneg %p47
        $region18: #{tpu_custom_call.1} parent=15 // pred_check_branch
          %102 = sbr.rel (%p100) target = $region20
        $region19: #{tpu_custom_call.1} parent=15 // pred_region
          %s103 = sand.u32 %s37, 1
          %s104 = scalar_lea.sflag [#allocation3], %s103
          %s105 = sand.u32 %s37, 1
          %s106 = smul.addr %s105, 16
          %s107 = scalar_lea.vmem [#allocation2], %s106
          %s108 = smul.u32 2, %s20
          %s110 = ssub.s32 256, 256
          %111 = vsyncadd %s104, %s110
          %s112 = smul.addr %s108, 3
          %s113 = sadd.s32 %s21, %s112
          %s114 = smul.addr %s113, 128
          %s115 = scalar_lea.hbm %s0, %s114
          %s116 = sshll.u32 %s107, 4
          %s117 = int_to_ptr.vmem [resolvable:$true] %s116
          %122 = dma.hbm_to_vmem [thread:$0]  %s115, 256, %s117, %s104, 384, 128, 8
        $region20: #{tpu_custom_call.1} parent=15 // pred_fallthru
          _
      $region16: #{tpu_custom_call.1} parent=5 // pred_fallthru
        _
      %p123 = scmp.le.s32.totalorder 1, %s13
      %p124 = scmp.lt.s32.totalorder %s13, 4
      %p125 = pnand %p123, %p124
      %p126 = pneg %p125
      // Predicated region
      $region21: #{tpu_custom_call.1} parent=5 // pred_check
        _
      $region22: #{tpu_custom_call.1} parent=5 // pred_check_branch
        %128 = sbr.rel (%p125) target = $region24
      $region23: #{tpu_custom_call.1} parent=5 // pred_region
        %s129 = ssub.s32 %s13, 1
        %s130 = sand.u32 %s40, 1
        %s131 = scalar_lea.sflag [#allocation3], %s130
        %s132 = sand.u32 %s40, 1
        %s133 = smul.addr %s132, 16
        %s134 = scalar_lea.vmem [#allocation2], %s133
        // Predicated region
        $region25: #{tpu_custom_call.1} parent=23 // pred_check
          %p135 = pneg %p53
        $region26: #{tpu_custom_call.1} parent=23 // pred_check_branch
          %137 = sbr.rel (%p135) target = $region28
        $region27: #{tpu_custom_call.1} parent=23 // pred_region
          %138 = dma.done %s131, 256
        $region28: #{tpu_custom_call.1} parent=23 // pred_fallthru
          _
        %s139 = sand.u32 %s40, 1
        %s140 = scalar_lea.sflag [#allocation3], %s139
        %s141 = sand.u32 %s40, 1
        %s142 = smul.addr %s141, 16
        %s143 = scalar_lea.vmem [#allocation2], %s142
        %p144 = pneg %p53
        %p145 = pneg %p50
        %p146 = pneg %p81
        %p147 = pneg %p78
        %s148 = sand.u32 %s68, 1
        %s149 = scalar_lea.sflag [#allocation4], %s148
        %s150 = sand.u32 %s68, 1
        %s151 = smul.addr %s150, 16
        %s152 = scalar_lea.vmem [#allocation5], %s151
        %s153 = smul.u32 2, %s22
        %s154 = smul.u32 2, %s22
        %v155 = vld [vmem:[%s134] sm:$0xff]
        %v156 = vld [vmem:[%s134 + $0x8] sm:$0xff]
        %v157 = vtanh.pop %v155
        %v158 = vtanh.pop %v156
        %159 = vst [vmem:[%s152] sm:$0xff] %v157
        %160 = vst [vmem:[%s152 + $0x8] sm:$0xff] %v158
        %s161 = sand.u32 %s68, 1
        %s162 = scalar_lea.sflag [#allocation4], %s161
        %s163 = sand.u32 %s68, 1
        %s164 = smul.addr %s163, 16
        %s165 = scalar_lea.vmem [#allocation5], %s164
        // Predicated region
        $region29: #{tpu_custom_call.1} parent=23 // pred_check
          %p166 = pneg %p78
        $region30: #{tpu_custom_call.1} parent=23 // pred_check_branch
          %168 = sbr.rel (%p166) target = $region32
        $region31: #{tpu_custom_call.1} parent=23 // pred_region
          %s169 = smul.u32 2, %s22
          %s171 = ssub.s32 256, 256
          %172 = vsyncadd %s162, %s171
          %s173 = smul.addr %s169, 3
          %s174 = sadd.s32 %s23, %s173
          %s175 = smul.addr %s174, 128
          %s176 = scalar_lea.hbm %s1, %s175
          %s177 = sshll.u32 %s165, 4
          %s178 = int_to_ptr.vmem [resolvable:$true] %s177
          %183 = dma.vmem_to_hbm [thread:$0]  %s178, 256, %s176, %s162, 128, 384, 8
        $region32: #{tpu_custom_call.1} parent=23 // pred_fallthru
          _
      $region24: #{tpu_custom_call.1} parent=5 // pred_fallthru
        _
      %p184 = scmp.le.s32.totalorder 2, %s13
      // Predicated region
      $region33: #{tpu_custom_call.1} parent=5 // pred_check
        %p185 = pneg %p184
      $region34: #{tpu_custom_call.1} parent=5 // pred_check_branch
        %187 = sbr.rel (%p185) target = $region36
      $region35: #{tpu_custom_call.1} parent=5 // pred_region
        %s188 = ssub.s32 %s13, 2
        // Predicated region
        $region37: #{tpu_custom_call.1} parent=35 // pred_check
          %p189 = pneg %p84
        $region38: #{tpu_custom_call.1} parent=35 // pred_check_branch
          %191 = sbr.rel (%p189) target = $region40
        $region39: #{tpu_custom_call.1} parent=35 // pred_region
          %s192 = sand.u32 %s69, 1
          %s193 = scalar_lea.sflag [#allocation4], %s192
          %s194 = sand.u32 %s69, 1
          %s195 = smul.addr %s194, 16
          %s196 = scalar_lea.vmem [#allocation5], %s195
          %197 = dma.done %s193, 256
        $region40: #{tpu_custom_call.1} parent=35 // pred_fallthru
          _
      $region36: #{tpu_custom_call.1} parent=5 // pred_fallthru
        _
    $region6: #{tpu_custom_call.1} parent=1 // loop_footer
      %s17 = sadd.s32 1, %s13
    $region7: #{tpu_custom_call.1} parent=1 // loop_footer_branch
      %12 = sbr.rel target = $region3
    $region8: #{tpu_custom_call.1} parent=1 // loop_exit
      _
    %198 = vsyncpa [#allocation3], 1
    %s199 = scalar_lea.sflag [#allocation3], 1
    %200 = vsyncpa %s199, 1
    %201 = vsyncpa [#allocation4], 1
    %s202 = scalar_lea.sflag [#allocation4], 1
    %203 = vsyncpa %s202, 1

</llo_original>
